<compile_context>
chip_gen: v5e
topology: v5e:2x2
jax: 0.10.0
libtpu: 0.0.40
codegen_flags: <defaults>
</compile_context>

<pallas_src>
import jax
import jax.numpy as jnp
from jax.experimental import pallas as pl
from jax.experimental.pallas import tpu as pltpu

LANES = 128               # vreg lane width
SUBLANES = 8              # vreg sublane height (min f32 tile rows)
DEFAULT_TILE_ROWS = 2048  # 2048*128*4B = 1 MiB block (~86% of HBM roofline regime)
MIN_TILE_ROWS = 256       # keep the ~0.35us per-grid-step overhead amortized
MAX_TILE_ROWS = 4096      # 2 MiB block; double-buffered in+out = 8 MiB VMEM, safe on all gens


def _round_up(a: int, m: int) -> int:
    return ((a + m - 1) // m) * m


def linear_kernel(w_ref, b_ref, x_ref, o_ref):
    # w_ref, b_ref: (1,) f32 scalars in SMEM.  x_ref, o_ref: (tile_r, 128) f32 in VMEM.
    # Pure VPU fused mul-add: no MXU, no cross-lane traffic, fully lane-dense stores.
    o_ref[...] = x_ref[...] * w_ref[0] + b_ref[0]


def linear_regression_forward(x, weight, bias, tile_rows=DEFAULT_TILE_ROWS, use_pallas=None):
    """PyTorch nn.Linear(1, 1) forward.

    x: (N, 1) f32, weight: (1, 1) f32 (PyTorch [out, in] layout), bias: (1,) f32.
    Returns (N, 1) f32 == x @ weight.T + bias.
    """
    n = x.shape[0]
    w_s = weight.reshape(1).astype(jnp.float32)  # scalar weight -> SMEM
    b_s = bias.reshape(1).astype(jnp.float32)    # scalar bias   -> SMEM

    if use_pallas is None:
        # Host-side dispatch: a standalone Linear(1,1) is best left to XLA's elementwise
        # fusion (no repack copies, no per-step overhead).  Route small inputs there.
        use_pallas = n >= 4 * LANES
    if not use_pallas:
        return (x.astype(jnp.float32) * w_s[0] + b_s[0]).reshape(n, 1)

    flat = x.reshape(-1).astype(jnp.float32)

    # Lane-dense repack: (N,1) -> (rows, 128).  Pad only to the 128-lane boundary
    # (<=127 elements); sublane/tile raggedness is handled by a non-divisible grid, so
    # when N % 128 == 0 both the pad and the tail slice vanish (no extra HBM traffic).
    rows = pl.cdiv(n, LANES)
    lane_pad = rows * LANES - n
    if lane_pad:
        flat = jnp.pad(flat, (0, lane_pad))
    x2 = flat.reshape(rows, LANES)

    # Tile-row selection:
    #  * round to a sublane multiple (the (8,128) block-shape constraint),
    #  * floor at 256 rows, cap at 4096 rows (2 MiB block -> fits every generation's
    #    scoped-VMEM default when double-buffered),
    #  * never exceed the data,
    #  * split into >=2 grid steps when possible so the "parallel" axis can feed both
    #    of v7x's TensorCores instead of collapsing to grid=(1,).
    if rows <= SUBLANES:
        tile_r = rows  # single block; second-to-last dim == full array dim is allowed
    else:
        tile_r = _round_up(max(int(tile_rows), SUBLANES), SUBLANES)
        tile_r = min(max(tile_r, MIN_TILE_ROWS), MAX_TILE_ROWS)
        tile_r = min(tile_r, _round_up(rows, SUBLANES))
        if pl.cdiv(rows, tile_r) < 2:
            tile_r = _round_up(pl.cdiv(rows, 2), SUBLANES)
    grid = (pl.cdiv(rows, tile_r),)  # ragged last block handled by Pallas

    y2 = pl.pallas_call(
        linear_kernel,
        out_shape=jax.ShapeDtypeStruct((rows, LANES), jnp.float32),
        grid=grid,
        in_specs=[
            pl.BlockSpec(memory_space=pltpu.MemorySpace.SMEM),  # weight scalar
            pl.BlockSpec(memory_space=pltpu.MemorySpace.SMEM),  # bias scalar
            pl.BlockSpec((tile_r, LANES), lambda i: (i, 0)),    # x tile
        ],
        out_specs=pl.BlockSpec((tile_r, LANES), lambda i: (i, 0)),
        compiler_params=pltpu.CompilerParams(
            dimension_semantics=("parallel",),  # independent row tiles -> 2 TCs on v7x
        ),
    )(w_s, b_s, x2)

    y = y2.reshape(-1)
    if lane_pad:
        y = y[:n]
    return y.reshape(n, 1)


if __name__ == "__main__":
    key = jax.random.PRNGKey(0)
    k_x, k_w, k_b, k_x2, k_x3 = jax.random.split(key, 5)

    # nn.Linear(1, 1) PyTorch default init: U(-1/sqrt(in), 1/sqrt(in)) = U(-1, 1)
    weight = jax.random.uniform(k_w, (1, 1), jnp.float32, minval=-1.0, maxval=1.0)
    bias = jax.random.uniform(k_b, (1,), jnp.float32, minval=-1.0, maxval=1.0)

    # 1) Tiny batch (batch=8, in_features=1): single (1,128) block, lane-pad path.
    x_small = jax.random.normal(k_x, (8, 1), jnp.float32)
    y_small = linear_regression_forward(x_small, weight, bias, use_pallas=True)
    jax.block_until_ready(y_small)
    ref_small = x_small @ weight.T + bias
    assert jnp.allclose(y_small, ref_small, atol=1e-6, rtol=1e-6), "mismatch (small)"

    # 2) Ragged batch: lane pad (48 elems) + 2 grid steps, default tile selection.
    x_big = jax.random.normal(k_x2, (2000, 1), jnp.float32)
    y_big = linear_regression_forward(x_big, weight, bias, use_pallas=True)
    jax.block_until_ready(y_big)
    ref_big = x_big @ weight.T + bias
    assert jnp.allclose(y_big, ref_big, atol=1e-6, rtol=1e-6), "mismatch (big)"

    # 3) 128-aligned batch: zero-copy path (no pad, no slice) + non-divisible grid.
    x_aligned = jax.random.normal(k_x3, (4224, 1), jnp.float32)  # 33 * 128
    y_aligned = linear_regression_forward(x_aligned, weight, bias, use_pallas=True)
    jax.block_until_ready(y_aligned)
    ref_aligned = x_aligned @ weight.T + bias
    assert jnp.allclose(y_aligned, ref_aligned, atol=1e-6, rtol=1e-6), "mismatch (aligned)"

    # 4) Host-side dispatch sanity check (tiny N auto-routes to a plain XLA fusion).
    y_xla = linear_regression_forward(x_small, weight, bias)
    jax.block_until_ready(y_xla)
    assert jnp.allclose(y_xla, ref_small, atol=1e-6, rtol=1e-6), "mismatch (xla path)"

    print("KERNEL_OK")
</pallas_src>

<mosaic_0001>
module attributes {stable_mosaic.version = 11 : i64} {
  func.func @linear_kernel(%arg0: i32, %arg1: memref<1xf32, #tpu.memory_space<smem>>, %arg2: memref<1xf32, #tpu.memory_space<smem>>, %arg3: memref<1x128xf32, #tpu.memory_space<vmem>>, %arg4: memref<1x128xf32, #tpu.memory_space<vmem>>) attributes {dimension_semantics = [#tpu.dimension_semantics<parallel>], iteration_bounds = array<i64: 1>, scalar_prefetch = 0 : i64, scratch_operands = 0 : i64, tpu.core_type = #tpu.core_type<tc>, window_params = [{transform_indices = @transform_0, window_bounds = array<i64: 1>}, {transform_indices = @transform_1, window_bounds = array<i64: 1>}, {transform_indices = @transform_2, window_bounds = array<i64: 1, 128>}, {transform_indices = @transform_3, window_bounds = array<i64: 1, 128>}]} {
    %c0 = arith.constant 0 : index
    %c0_0 = arith.constant 0 : index
    %0 = vector.load %arg3[%c0, %c0_0] : memref<1x128xf32, #tpu.memory_space<vmem>>, vector<1x128xf32>
    %c0_1 = arith.constant 0 : index
    %1 = memref.load %arg1[%c0_1] : memref<1xf32, #tpu.memory_space<smem>>
    %2 = vector.broadcast %1 : f32 to vector<1x128xf32>
    %3 = arith.mulf %0, %2 : vector<1x128xf32>
    %c0_2 = arith.constant 0 : index
    %4 = memref.load %arg2[%c0_2] : memref<1xf32, #tpu.memory_space<smem>>
    %5 = vector.broadcast %4 : f32 to vector<1x128xf32>
    %6 = arith.addf %3, %5 : vector<1x128xf32>
    %c0_3 = arith.constant 0 : index
    %c0_4 = arith.constant 0 : index
    %7 = vector.load %arg4[%c0_3, %c0_4] : memref<1x128xf32, #tpu.memory_space<vmem>>, vector<1x128xf32>
    tpu.vector_store %arg4[%c0_3, %c0_4], %6 {strides = array<i32>} : memref<1x128xf32, #tpu.memory_space<vmem>>, vector<1x128xf32>,
    return
  }
  func.func @transform_0(%arg0: i32) -> i32 {
    %c0_i32 = arith.constant 0 : i32
    %c0_i32_0 = arith.constant 0 : i32
    return %c0_i32 : i32
  }
  func.func @transform_1(%arg0: i32) -> i32 {
    %c0_i32 = arith.constant 0 : i32
    %c0_i32_0 = arith.constant 0 : i32
    return %c0_i32 : i32
  }
  func.func @transform_2(%arg0: i32) -> (i32, i32) {
    %c0_i32 = arith.constant 0 : i32
    %c0_i32_0 = arith.constant 0 : i32
    return %arg0, %c0_i32 : i32, i32
  }
  func.func @transform_3(%arg0: i32) -> (i32, i32) {
    %c0_i32 = arith.constant 0 : i32
    %c0_i32_0 = arith.constant 0 : i32
    return %arg0, %c0_i32 : i32, i32
  }
}

</mosaic_0001>

<llo_original>
// kernel: tpu_custom_call.1
$region0: #{tpu_custom_call.1}
  #allocation0 [shape = 'u32[]', space=smem, size = 0x4, offset = 0x4, fixed_abs, tag = 'smem constant byte address 0x4 - core index']
  #allocation1 [shape = 'u32[72,128]{1,0:T(1,128)}', space=vmem, size = 0x9000, scoped, tag = 'internal scratch']
  #allocation2 [shape = 'f32[1]{0:T(128)S(6)}', space=smem, size = 0x200, scoped, tag = 'scoped memory for tpu_custom_call.1']
  #allocation3 [shape = 'f32[1]{0:T(128)S(6)}', space=smem, size = 0x200, scoped, tag = 'scoped memory for tpu_custom_call.1']
  %s0 = inlined_call_operand.<no memory space> [shape: f32[1], index: 0, kind: input, shape index: {}]
  %s1 = inlined_call_operand.<no memory space> [shape: f32[1], index: 1, kind: input, shape index: {}]
  %s2 = inlined_call_operand.vmem [shape: f32[1,128], index: 2, kind: input, shape index: {}]
  %s3 = inlined_call_operand.hbm [shape: f32[1,128], index: 3, kind: output, shape index: {}]
  %s4 = sld [smem:[#allocation0]]
  $region22: #{tpu_custom_call.1} parent=0
    _
  %s6 = ssub.s32 1, %s4
  %s7 = scalar_select 0, %s6, %s4
  %8 = sst [smem:[#allocation2]] %s0
  %9 = sst [smem:[#allocation3]] %s1
  $region1: #{tpu_custom_call.1} parent=0
    #allocation4 [shape = 'u8[512]{0}', space=vmem, size = 0x400, scoped, tag = 'output window, operand 0, single buffered']
    #allocation5 [shape = 's32[1]{0}', space=sflag, size = 0x4, scoped, tag = 'scoped memory for tpu_custom_call.1']
    %10 = vsyncpa [#allocation5], 0
    // Predicated region
    $region2: #{tpu_custom_call.1} parent=1 // pred_check
      _
    $region3: #{tpu_custom_call.1} parent=1 // pred_check_branch
      %12 = sbr.rel (0) target = $region5
    $region4: #{tpu_custom_call.1} parent=1 // pred_region
      _
    $region5: #{tpu_custom_call.1} parent=1 // pred_fallthru
      _
    // Predicated region
    $region6: #{tpu_custom_call.1} parent=1 // pred_check
      _
    $region7: #{tpu_custom_call.1} parent=1 // pred_check_branch
      %14 = sbr.rel (0) target = $region9
    $region8: #{tpu_custom_call.1} parent=1 // pred_region
      _
    $region9: #{tpu_custom_call.1} parent=1 // pred_fallthru
      _
    // Predicated region
    $region10: #{tpu_custom_call.1} parent=1 // pred_check
      _
    $region11: #{tpu_custom_call.1} parent=1 // pred_check_branch
      %16 = sbr.rel (0) target = $region13
    $region12: #{tpu_custom_call.1} parent=1 // pred_region
      _
    $region13: #{tpu_custom_call.1} parent=1 // pred_fallthru
      _
    %v17 = vld [vmem:[%s2] sm:$0x1]
    %s18 = sld [smem:[#allocation2]]
    %v19 = vstv %s18
    %v20 = vmul.f32 %v17, %v19
    %s21 = sld [smem:[#allocation3]]
    %v22 = vstv %s21
    %v23 = vadd.f32 %v20, %v22
    %24 = vst [vmem:[#allocation4] sm:$0x1] %v23
    // Predicated region
    $region14: #{tpu_custom_call.1} parent=1 // pred_check
      _
    $region15: #{tpu_custom_call.1} parent=1 // pred_check_branch
      %26 = sbr.rel (0) target = $region17
    $region16: #{tpu_custom_call.1} parent=1 // pred_region
      %28 = vsyncadd [#allocation5], 0
      %s30 = sshll.u32 [#allocation4], 4
      %s31 = int_to_ptr.vmem [resolvable:$true] %s30
      %s32 = sshll.u32 %s3, 4
      %s33 = int_to_ptr.hbm [resolvable:$true] %s32
      %35 = dma.vmem_to_hbm [thread:$0]  %s31, 16, %s33, [#allocation5]
    $region17: #{tpu_custom_call.1} parent=1 // pred_fallthru
      _
    // Predicated region
    $region18: #{tpu_custom_call.1} parent=1 // pred_check
      _
    $region19: #{tpu_custom_call.1} parent=1 // pred_check_branch
      %37 = sbr.rel (0) target = $region21
    $region20: #{tpu_custom_call.1} parent=1 // pred_region
      %39 = dma.done [#allocation5], 16
    $region21: #{tpu_custom_call.1} parent=1 // pred_fallthru
      _
    %40 = vsyncpa [#allocation5], 1

</llo_original>
